<compile_context>
chip_gen: v5e
topology: v5e:2x2
jax: 0.10.0
libtpu: 0.0.40
codegen_flags: <defaults>
</compile_context>

<pallas_src>
import functools

import jax
import jax.numpy as jnp
import numpy as np
from jax.experimental import pallas as pl
from jax.experimental.pallas import tpu as pltpu

KH = KW = 4
STRIDE = 2
PAD = 1
BN_EPS = 1e-5
LEAKY_SLOPE = 0.2


def _round_up(x, m):
    return ((x + m - 1) // m) * m


def _stats_kernel(patches_ref, w_ref, gb_ref, stats_ref, *, inv_count):
    """Pass 1: accumulate per-channel sum / sum-of-squares of the conv output
    across M tiles; at the last tile fold them (with gamma/beta) into
    per-channel scale/shift stored in stats_ref rows 0/1."""
    i = pl.program_id(0)

    @pl.when(i == 0)
    def _():
        stats_ref[...] = jnp.zeros_like(stats_ref)

    # conv tile as MXU matmul, bf16 inputs, f32 accumulation.
    y = jnp.dot(patches_ref[...], w_ref[...], preferred_element_type=jnp.float32)

    stats_ref[0:1, :] += jnp.sum(y, axis=0, keepdims=True)
    stats_ref[1:2, :] += jnp.sum(y * y, axis=0, keepdims=True)

    @pl.when(i == pl.num_programs(0) - 1)
    def _():
        s = stats_ref[0:1, :]
        ss = stats_ref[1:2, :]
        mean = s * inv_count
        # E[x^2] - E[x]^2 in f32; clamp tiny negative values from cancellation.
        var = jnp.maximum(ss * inv_count - mean * mean, 0.0)
        gamma = gb_ref[0:1, :]
        beta = gb_ref[1:2, :]
        scale = gamma * jax.lax.rsqrt(var + BN_EPS)
        shift = beta - mean * scale
        stats_ref[0:1, :] = scale
        stats_ref[1:2, :] = shift


def _apply_kernel(patches_ref, w_ref, stats_ref, o_ref):
    """Pass 2: recompute the conv tile, apply folded BN scale/shift + LeakyReLU."""
    y = jnp.dot(patches_ref[...], w_ref[...], preferred_element_type=jnp.float32)
    scale = stats_ref[0:1, :]
    shift = stats_ref[1:2, :]
    y_bn = y * scale + shift
    o_ref[...] = jnp.where(y_bn >= 0, y_bn, LEAKY_SLOPE * y_bn)


@functools.partial(jax.jit, static_argnames=("tile_m",))
def conv_block_nhwc(x_nhwc, w_oihw, bias, gamma, beta, tile_m=None):
    """x_nhwc: (N,H,W,Cin) f32; w_oihw: (Cout,Cin,KH,KW) (PyTorch layout)."""
    del bias  # exactly cancelled by training-mode BN mean subtraction

    N, H, W, Cin = x_nhwc.shape
    Cout = w_oihw.shape[0]
    Ho = (H + 2 * PAD - KH) // STRIDE + 1
    Wo = (W + 2 * PAD - KW) // STRIDE + 1
    M = N * Ho * Wo
    Kdim = KH * KW * Cin
    Cout_p = _round_up(Cout, 128)            # lane-dense output / MXU N dim

    if tile_m is None:
        tile_m = min(512, _round_up(M, 8))   # 512 ~ HBM-roofline sweet spot
    tile_m = _round_up(tile_m, 8)
    M_pad = _round_up(M, tile_m)
    n_tiles = M_pad // tile_m

    # --- im2col (bf16) ---  patch column order is (kh, kw, cin)
    # TODO(synk): move this gather in-kernel (shifted-matmul accumulation).
    xp = jnp.pad(x_nhwc.astype(jnp.bfloat16),
                 ((0, 0), (PAD, PAD), (PAD, PAD), (0, 0)))
    cols = []
    for kh in range(KH):
        for kw in range(KW):
            cols.append(xp[:, kh:kh + STRIDE * Ho:STRIDE,
                           kw:kw + STRIDE * Wo:STRIDE, :])
    patches = jnp.concatenate(cols, axis=-1).reshape(M, Kdim)
    if M_pad > M:
        patches = jnp.pad(patches, ((0, M_pad - M), (0, 0)))  # zero rows: no effect on stats

    # weight (Cout,Cin,KH,KW) -> (KH,KW,Cin,Cout) -> (Kdim, Cout_p), bf16
    w_mat = jnp.transpose(w_oihw, (2, 3, 1, 0)).reshape(Kdim, Cout)
    w_mat = w_mat.astype(jnp.bfloat16)
    if Cout_p > Cout:
        w_mat = jnp.pad(w_mat, ((0, 0), (0, Cout_p - Cout)))

    # gamma/beta packed into one sublane-aligned (8, Cout_p) f32 block.
    gb = jnp.zeros((8, Cout_p), jnp.float32)
    gb = gb.at[0, :Cout].set(gamma.astype(jnp.float32))
    gb = gb.at[1, :Cout].set(beta.astype(jnp.float32))

    # -------- pass 1: batch statistics -> folded scale/shift --------
    stats = pl.pallas_call(
        functools.partial(_stats_kernel, inv_count=1.0 / float(M)),
        out_shape=jax.ShapeDtypeStruct((8, Cout_p), jnp.float32),
        grid=(n_tiles,),
        in_specs=[
            pl.BlockSpec((tile_m, Kdim), lambda i: (i, 0)),
            pl.BlockSpec((Kdim, Cout_p), lambda i: (0, 0)),
            pl.BlockSpec((8, Cout_p), lambda i: (0, 0)),
        ],
        out_specs=pl.BlockSpec((8, Cout_p), lambda i: (0, 0)),  # resident accumulator
        compiler_params=pltpu.CompilerParams(
            dimension_semantics=("arbitrary",)),
    )(patches, w_mat, gb)

    # -------- pass 2: conv + folded BN + LeakyReLU --------
    out_flat = pl.pallas_call(
        _apply_kernel,
        out_shape=jax.ShapeDtypeStruct((M_pad, Cout_p), jnp.float32),
        grid=(n_tiles,),
        in_specs=[
            pl.BlockSpec((tile_m, Kdim), lambda i: (i, 0)),
            pl.BlockSpec((Kdim, Cout_p), lambda i: (0, 0)),
            pl.BlockSpec((8, Cout_p), lambda i: (0, 0)),
        ],
        out_specs=pl.BlockSpec((tile_m, Cout_p), lambda i: (i, 0)),
        compiler_params=pltpu.CompilerParams(
            dimension_semantics=("parallel",)),   # independent tiles -> megacore
    )(patches, w_mat, stats)

    return out_flat[:M, :Cout].reshape(N, Ho, Wo, Cout)


def conv_block_nchw(x_nchw, w_oihw, bias, gamma, beta, tile_m=None):
    """Matches PyTorch ConvBlock.forward on an NCHW input, returns NCHW."""
    x_nhwc = jnp.transpose(x_nchw, (0, 2, 3, 1))
    y_nhwc = conv_block_nhwc(x_nhwc, w_oihw, bias, gamma, beta, tile_m=tile_m)
    return jnp.transpose(y_nhwc, (0, 3, 1, 2))


def _reference_nchw(x_nchw, w_oihw, bias, gamma, beta):
    """Pure-JAX f32 reference (conv+bias -> batchnorm(train) -> leakyrelu), NCHW."""
    x_nhwc = jnp.transpose(x_nchw, (0, 2, 3, 1))
    w_hwio = jnp.transpose(w_oihw, (2, 3, 1, 0))
    y = jax.lax.conv_general_dilated(
        x_nhwc, w_hwio, window_strides=(STRIDE, STRIDE),
        padding=((PAD, PAD), (PAD, PAD)),
        dimension_numbers=("NHWC", "HWIO", "NHWC")) + bias
    mean = y.mean(axis=(0, 1, 2))
    var = ((y - mean) ** 2).mean(axis=(0, 1, 2))
    y_bn = (y - mean) * jax.lax.rsqrt(var + BN_EPS) * gamma + beta
    y_act = jnp.where(y_bn >= 0, y_bn, LEAKY_SLOPE * y_bn)
    return jnp.transpose(y_act, (0, 3, 1, 2))


if __name__ == "__main__":
    # TODO(synk): BatchNorm running_mean/running_var momentum update is
    # training-time state and is not reproduced; forward uses batch stats.
    dim_in, dim_out = 4, 8
    N, H, W = 2, 16, 16

    key = jax.random.PRNGKey(0)
    k_x, k_w, k_b, k_g, k_be = jax.random.split(key, 5)

    x = jax.random.normal(k_x, (N, dim_in, H, W), dtype=jnp.float32)          # NCHW like torch
    w = jax.random.normal(k_w, (dim_out, dim_in, KH, KW), jnp.float32) * 0.1    # Conv2d.weight
    b = jax.random.normal(k_b, (dim_out,), jnp.float32) * 0.1                   # Conv2d.bias
    gamma = 1.0 + 0.1 * jax.random.normal(k_g, (dim_out,), jnp.float32)         # BatchNorm weight
    beta = 0.1 * jax.random.normal(k_be, (dim_out,), jnp.float32)               # BatchNorm bias

    # tile_m=64 so the toy shape (M=128) exercises the multi-tile accumulation
    # path; real shapes default to 512-row tiles.
    out = conv_block_nchw(x, w, b, gamma, beta, tile_m=64)
    out = jax.block_until_ready(out)

    ref = jax.block_until_ready(_reference_nchw(x, w, b, gamma, beta))
    # bf16 matmul operands (f32 accumulation) -> compare at bf16-level tolerance.
    np.testing.assert_allclose(np.asarray(out), np.asarray(ref), rtol=5e-2, atol=5e-2)
    assert out.shape == (N, dim_out, H // 2, W // 2)

    print("KERNEL_OK")
</pallas_src>

<mosaic_0001>
module attributes {stable_mosaic.version = 11 : i64} {
  func.func @_stats_kernel(%arg0: i32, %arg1: memref<64x64xbf16, #tpu.memory_space<vmem>>, %arg2: memref<64x128xbf16, #tpu.memory_space<vmem>>, %arg3: memref<8x128xf32, #tpu.memory_space<vmem>>, %arg4: memref<8x128xf32, #tpu.memory_space<vmem>>) attributes {dimension_semantics = [#tpu.dimension_semantics<arbitrary>], iteration_bounds = array<i64: 2>, scalar_prefetch = 0 : i64, scratch_operands = 0 : i64, tpu.core_type = #tpu.core_type<tc>, window_params = [{transform_indices = @transform_0, window_bounds = array<i64: 64, 64>}, {pipeline_mode = #tpu.pipeline_mode<synchronous>, transform_indices = @transform_1, window_bounds = array<i64: 64, 128>}, {pipeline_mode = #tpu.pipeline_mode<synchronous>, transform_indices = @transform_2, window_bounds = array<i64: 8, 128>}, {pipeline_mode = #tpu.pipeline_mode<synchronous>, transform_indices = @transform_3, window_bounds = array<i64: 8, 128>}]} {
    %c0_i32 = arith.constant 0 : i32
    %0 = arith.cmpi eq, %arg0, %c0_i32 : i32
    %1 = arith.extui %0 : i1 to i32
    %c0_i32_0 = arith.constant 0 : i32
    %2 = arith.cmpi ne, %1, %c0_i32_0 : i32
    scf.if %2 {
      %cst_14 = arith.constant 0.000000e+00 : f32
      %20 = vector.broadcast %cst_14 : f32 to vector<8x128xf32>
      %c0_15 = arith.constant 0 : index
      %c0_16 = arith.constant 0 : index
      %21 = vector.load %arg4[%c0_15, %c0_16] : memref<8x128xf32, #tpu.memory_space<vmem>>, vector<8x128xf32>
      tpu.vector_store %arg4[%c0_15, %c0_16], %20 {strides = array<i32>} : memref<8x128xf32, #tpu.memory_space<vmem>>, vector<8x128xf32>,
    } else {
    }
    %c0 = arith.constant 0 : index
    %c0_1 = arith.constant 0 : index
    %3 = vector.load %arg1[%c0, %c0_1] : memref<64x64xbf16, #tpu.memory_space<vmem>>, vector<64x64xbf16>
    %c0_2 = arith.constant 0 : index
    %c0_3 = arith.constant 0 : index
    %4 = vector.load %arg2[%c0_2, %c0_3] : memref<64x128xbf16, #tpu.memory_space<vmem>>, vector<64x128xbf16>
    %cst = arith.constant dense<0.000000e+00> : vector<64x128xf32>
    %5 = tpu.matmul %3, %4, %cst {dimension_numbers = #tpu.dot_dimension_numbers<[1], [0], [0], [1], [0, 0, 1, 1], [], []>} : vector<64x64xbf16>, vector<64x128xbf16>, vector<64x128xf32> -> vector<64x128xf32>
    %c0_4 = arith.constant 0 : index
    %c0_5 = arith.constant 0 : index
    %6 = vector.load %arg4[%c0_4, %c0_5] : memref<8x128xf32, #tpu.memory_space<vmem>>, vector<1x128xf32>
    %cst_6 = arith.constant dense<0.000000e+00> : vector<128xf32>
    %7 = vector.multi_reduction <add>, %5, %cst_6 [0] : vector<64x128xf32> to vector<128xf32>
    %8 = vector.shape_cast %7 : vector<128xf32> to vector<1x128xf32>
    %9 = arith.addf %6, %8 : vector<1x128xf32>
    %c0_7 = arith.constant 0 : index
    %c0_8 = arith.constant 0 : index
    %10 = vector.load %arg4[%c0_7, %c0_8] : memref<8x128xf32, #tpu.memory_space<vmem>>, vector<1x128xf32>
    tpu.vector_store %arg4[%c0_7, %c0_8], %9 {strides = array<i32>} : memref<8x128xf32, #tpu.memory_space<vmem>>, vector<1x128xf32>,
    %c1 = arith.constant 1 : index
    %c0_9 = arith.constant 0 : index
    %11 = vector.load %arg4[%c1, %c0_9] : memref<8x128xf32, #tpu.memory_space<vmem>>, vector<1x128xf32>
    %12 = arith.mulf %5, %5 : vector<64x128xf32>
    %cst_10 = arith.constant dense<0.000000e+00> : vector<128xf32>
    %13 = vector.multi_reduction <add>, %12, %cst_10 [0] : vector<64x128xf32> to vector<128xf32>
    %14 = vector.shape_cast %13 : vector<128xf32> to vector<1x128xf32>
    %15 = arith.addf %11, %14 : vector<1x128xf32>
    %c1_11 = arith.constant 1 : index
    %c0_12 = arith.constant 0 : index
    %16 = vector.load %arg4[%c1_11, %c0_12] : memref<8x128xf32, #tpu.memory_space<vmem>>, vector<1x128xf32>
    tpu.vector_store %arg4[%c1_11, %c0_12], %15 {strides = array<i32>} : memref<8x128xf32, #tpu.memory_space<vmem>>, vector<1x128xf32>,
    %c1_i32 = arith.constant 1 : i32
    %17 = arith.cmpi eq, %arg0, %c1_i32 : i32
    %18 = arith.extui %17 : i1 to i32
    %c0_i32_13 = arith.constant 0 : i32
    %19 = arith.cmpi ne, %18, %c0_i32_13 : i32
    scf.if %19 {
      %c0_14 = arith.constant 0 : index
      %c0_15 = arith.constant 0 : index
      %20 = vector.load %arg4[%c0_14, %c0_15] : memref<8x128xf32, #tpu.memory_space<vmem>>, vector<1x128xf32>
      %c1_16 = arith.constant 1 : index
      %c0_17 = arith.constant 0 : index
      %21 = vector.load %arg4[%c1_16, %c0_17] : memref<8x128xf32, #tpu.memory_space<vmem>>, vector<1x128xf32>
      %cst_18 = arith.constant 7.812500e-03 : f32
      %22 = vector.broadcast %cst_18 : f32 to vector<1x128xf32>
      %23 = arith.mulf %20, %22 : vector<1x128xf32>
      %cst_19 = arith.constant 7.812500e-03 : f32
      %24 = vector.broadcast %cst_19 : f32 to vector<1x128xf32>
      %25 = arith.mulf %21, %24 : vector<1x128xf32>
      %26 = arith.mulf %23, %23 : vector<1x128xf32>
      %27 = arith.subf %25, %26 : vector<1x128xf32>
      %cst_20 = arith.constant 0.000000e+00 : f32
      %28 = vector.broadcast %cst_20 : f32 to vector<1x128xf32>
      %29 = arith.maximumf %27, %28 : vector<1x128xf32>
      %c0_21 = arith.constant 0 : index
      %c0_22 = arith.constant 0 : index
      %30 = vector.load %arg3[%c0_21, %c0_22] : memref<8x128xf32, #tpu.memory_space<vmem>>, vector<1x128xf32>
      %c1_23 = arith.constant 1 : index
      %c0_24 = arith.constant 0 : index
      %31 = vector.load %arg3[%c1_23, %c0_24] : memref<8x128xf32, #tpu.memory_space<vmem>>, vector<1x128xf32>
      %cst_25 = arith.constant 9.99999974E-6 : f32
      %32 = vector.broadcast %cst_25 : f32 to vector<1x128xf32>
      %33 = arith.addf %29, %32 : vector<1x128xf32>
      %34 = math.rsqrt %33 : vector<1x128xf32>
      %35 = arith.mulf %30, %34 : vector<1x128xf32>
      %36 = arith.mulf %23, %35 : vector<1x128xf32>
      %37 = arith.subf %31, %36 : vector<1x128xf32>
      %c0_26 = arith.constant 0 : index
      %c0_27 = arith.constant 0 : index
      %38 = vector.load %arg4[%c0_26, %c0_27] : memref<8x128xf32, #tpu.memory_space<vmem>>, vector<1x128xf32>
      tpu.vector_store %arg4[%c0_26, %c0_27], %35 {strides = array<i32>} : memref<8x128xf32, #tpu.memory_space<vmem>>, vector<1x128xf32>,
      %c1_28 = arith.constant 1 : index
      %c0_29 = arith.constant 0 : index
      %39 = vector.load %arg4[%c1_28, %c0_29] : memref<8x128xf32, #tpu.memory_space<vmem>>, vector<1x128xf32>
      tpu.vector_store %arg4[%c1_28, %c0_29], %37 {strides = array<i32>} : memref<8x128xf32, #tpu.memory_space<vmem>>, vector<1x128xf32>,
    } else {
    }
    return
  }
  func.func @transform_0(%arg0: i32) -> (i32, i32) {
    %c0_i32 = arith.constant 0 : i32
    %c0_i32_0 = arith.constant 0 : i32
    return %arg0, %c0_i32 : i32, i32
  }
  func.func @transform_1(%arg0: i32) -> (i32, i32) {
    %c0_i32 = arith.constant 0 : i32
    %c0_i32_0 = arith.constant 0 : i32
    %c0_i32_1 = arith.constant 0 : i32
    return %c0_i32, %c0_i32_0 : i32, i32
  }
  func.func @transform_2(%arg0: i32) -> (i32, i32) {
    %c0_i32 = arith.constant 0 : i32
    %c0_i32_0 = arith.constant 0 : i32
    %c0_i32_1 = arith.constant 0 : i32
    return %c0_i32, %c0_i32_0 : i32, i32
  }
  func.func @transform_3(%arg0: i32) -> (i32, i32) {
    %c0_i32 = arith.constant 0 : i32
    %c0_i32_0 = arith.constant 0 : i32
    %c0_i32_1 = arith.constant 0 : i32
    return %c0_i32, %c0_i32_0 : i32, i32
  }
}

module attributes {stable_mosaic.version = 11 : i64} {
  func.func @_apply_kernel(%arg0: i32, %arg1: memref<64x64xbf16, #tpu.memory_space<vmem>>, %arg2: memref<64x128xbf16, #tpu.memory_space<vmem>>, %arg3: memref<8x128xf32, #tpu.memory_space<vmem>>, %arg4: memref<64x128xf32, #tpu.memory_space<vmem>>) attributes {dimension_semantics = [#tpu.dimension_semantics<parallel>], iteration_bounds = array<i64: 2>, scalar_prefetch = 0 : i64, scratch_operands = 0 : i64, tpu.core_type = #tpu.core_type<tc>, window_params = [{transform_indices = @transform_0, window_bounds = array<i64: 64, 64>}, {pipeline_mode = #tpu.pipeline_mode<synchronous>, transform_indices = @transform_1, window_bounds = array<i64: 64, 128>}, {pipeline_mode = #tpu.pipeline_mode<synchronous>, transform_indices = @transform_2, window_bounds = array<i64: 8, 128>}, {transform_indices = @transform_3, window_bounds = array<i64: 64, 128>}]} {
    %c0 = arith.constant 0 : index
    %c0_0 = arith.constant 0 : index
    %0 = vector.load %arg1[%c0, %c0_0] : memref<64x64xbf16, #tpu.memory_space<vmem>>, vector<64x64xbf16>
    %c0_1 = arith.constant 0 : index
    %c0_2 = arith.constant 0 : index
    %1 = vector.load %arg2[%c0_1, %c0_2] : memref<64x128xbf16, #tpu.memory_space<vmem>>, vector<64x128xbf16>
    %cst = arith.constant dense<0.000000e+00> : vector<64x128xf32>
    %2 = tpu.matmul %0, %1, %cst {dimension_numbers = #tpu.dot_dimension_numbers<[1], [0], [0], [1], [0, 0, 1, 1], [], []>} : vector<64x64xbf16>, vector<64x128xbf16>, vector<64x128xf32> -> vector<64x128xf32>
    %c0_3 = arith.constant 0 : index
    %c0_4 = arith.constant 0 : index
    %3 = vector.load %arg3[%c0_3, %c0_4] : memref<8x128xf32, #tpu.memory_space<vmem>>, vector<1x128xf32>
    %c1 = arith.constant 1 : index
    %c0_5 = arith.constant 0 : index
    %4 = vector.load %arg3[%c1, %c0_5] : memref<8x128xf32, #tpu.memory_space<vmem>>, vector<1x128xf32>
    %5 = vector.broadcast %3 : vector<1x128xf32> to vector<64x128xf32>
    %6 = arith.mulf %2, %5 : vector<64x128xf32>
    %7 = vector.broadcast %4 : vector<1x128xf32> to vector<64x128xf32>
    %8 = arith.addf %6, %7 : vector<64x128xf32>
    %cst_6 = arith.constant 0.000000e+00 : f32
    %9 = vector.broadcast %cst_6 : f32 to vector<64x128xf32>
    %10 = arith.cmpf oge, %8, %9 : vector<64x128xf32>
    %cst_7 = arith.constant 2.000000e-01 : f32
    %11 = vector.broadcast %cst_7 : f32 to vector<64x128xf32>
    %12 = arith.mulf %11, %8 : vector<64x128xf32>
    %13 = arith.select %10, %8, %12 : vector<64x128xi1>, vector<64x128xf32>
    %c0_8 = arith.constant 0 : index
    %c0_9 = arith.constant 0 : index
    %14 = vector.load %arg4[%c0_8, %c0_9] : memref<64x128xf32, #tpu.memory_space<vmem>>, vector<64x128xf32>
    tpu.vector_store %arg4[%c0_8, %c0_9], %13 {strides = array<i32>} : memref<64x128xf32, #tpu.memory_space<vmem>>, vector<64x128xf32>,
    return
  }
  func.func @transform_0(%arg0: i32) -> (i32, i32) {
    %c0_i32 = arith.constant 0 : i32
    %c0_i32_0 = arith.constant 0 : i32
    return %arg0, %c0_i32 : i32, i32
  }
  func.func @transform_1(%arg0: i32) -> (i32, i32) {
    %c0_i32 = arith.constant 0 : i32
    %c0_i32_0 = arith.constant 0 : i32
    %c0_i32_1 = arith.constant 0 : i32
    return %c0_i32, %c0_i32_0 : i32, i32
  }
  func.func @transform_2(%arg0: i32) -> (i32, i32) {
    %c0_i32 = arith.constant 0 : i32
    %c0_i32_0 = arith.constant 0 : i32
    %c0_i32_1 = arith.constant 0 : i32
    return %c0_i32, %c0_i32_0 : i32, i32
  }
  func.func @transform_3(%arg0: i32) -> (i32, i32) {
    %c0_i32 = arith.constant 0 : i32
    %c0_i32_0 = arith.constant 0 : i32
    return %arg0, %c0_i32 : i32, i32
  }
}

</mosaic_0001>

<llo_original>
// kernel: conv_block_nhwc.3
$region0: #{conv_block_nhwc.3}
  #allocation0 [shape = 'u32[]', space=smem, size = 0x4, offset = 0x4, fixed_abs, tag = 'smem constant byte address 0x4 - core index']
  #allocation1 [shape = 'u32[72,128]{1,0:T(1,128)}', space=vmem, size = 0x9000, scoped, tag = 'internal scratch']
  %s0 = inlined_call_operand.vmem [shape: bf16[128,64], index: 0, kind: input, shape index: {}]
  %s1 = inlined_call_operand.vmem [shape: bf16[64,128], index: 1, kind: input, shape index: {}]
  %s2 = inlined_call_operand.vmem [shape: f32[8,128], index: 2, kind: input, shape index: {}]
  %s3 = inlined_call_operand.hbm [shape: f32[128,128], index: 3, kind: output, shape index: {}]
  %s4 = sld [smem:[#allocation0]]
  $region45: #{conv_block_nhwc.3} parent=0
    _
  %s6 = ssub.s32 1, %s4
  %s7 = scalar_select 0, %s6, %s4
  $region1: #{conv_block_nhwc.3} parent=0
    #allocation2 [shape = 'u8[65536]{0}', space=vmem, size = 0x10000, scoped, tag = 'output window, operand 0']
    #allocation3 [shape = 's32[2]{0}', space=sflag, size = 0x8, scoped, tag = 'scoped memory for conv_block_nhwc.3']
    %8 = vsyncpa [#allocation3], 0
    %s9 = scalar_lea.sflag [#allocation3], 1
    %10 = vsyncpa %s9, 0
    loop: start=0, step=1, limit=4
    $region2: #{conv_block_nhwc.3} parent=1 // loop_pre_header
      _
    $region3: #{conv_block_nhwc.3} parent=1 // loop_header
      %s12 = sphi 0, %s16
      %p13 = scmp.ge.s32.totalorder %s12, 4
      %s22 = sphi 0, %s24
      %s25 = sphi 0, %s22
      %s26 = sphi 0, %s25
      %s42 = sphi 0, %s26
      %s46 = sphi 0, %s46
      %s48 = sphi 0, %s46
      %s49 = sphi 0, %s48
      %s63 = sphi 0, %s49
      %s67 = sphi 0, %s67
      %s69 = sphi 0, %s67
      %s70 = sphi 0, %s69
      %s84 = sphi 0, %s70
      %s90 = sphi 0, %s92
      %s93 = sphi 0, %s90
      %s94 = sphi 0, %s93
      %s110 = sphi 0, %s94
    $region4: #{conv_block_nhwc.3} parent=1 // loop_header_branch
      %15 = sbr.rel (%p13) target = $region8
    $region5: #{conv_block_nhwc.3} parent=1 // loop_body
      %s17 = ssub.s32 %s12, 1
      %s18 = ssub.s32 %s12, 2
      %s19 = sadd.s32 %s12, 1
      %s20 = ssub.s32 %s12, %s19
      %p21 = scmp.eq.s32.totalorder %s20, 0
      %s23 = sadd.s32 %s22, 1
      %s24 = scalar_select %p21, %s22, %s23
      %p27 = pneg %p21
      %p28 = scmp.eq.s32.totalorder %s12, 1
      %p29 = por %p27, %p28
      %p30 = scmp.ne.s32.totalorder %s22, %s25
      %p31 = scmp.eq.s32.totalorder %s12, 0
      %p32 = por %p30, %p31
      %p33 = scmp.ne.s32.totalorder %s22, %s25
      %p34 = scmp.eq.s32.totalorder %s17, 1
      %p35 = por %p33, %p34
      %p36 = scmp.ne.s32.totalorder %s25, %s26
      %p37 = scmp.eq.s32.totalorder %s17, 0
      %p38 = por %p36, %p37
      %p39 = scmp.ne.s32.totalorder %s25, %s26
      %p40 = scmp.eq.s32.totalorder %s18, 1
      %p41 = por %p39, %p40
      %p43 = scmp.ne.s32.totalorder %s26, %s42
      %p44 = scmp.eq.s32.totalorder %s18, 0
      %p45 = por %p43, %p44
      %s47 = sadd.s32 %s46, 1
      %p50 = scmp.eq.s32.totalorder %s12, 1
      %p51 = scmp.ne.s32.totalorder %s46, %s48
      %p52 = scmp.eq.s32.totalorder %s12, 0
      %p53 = por %p51, %p52
      %p54 = scmp.ne.s32.totalorder %s46, %s48
      %p55 = scmp.eq.s32.totalorder %s17, 1
      %p56 = por %p54, %p55
      %p57 = scmp.ne.s32.totalorder %s48, %s49
      %p58 = scmp.eq.s32.totalorder %s17, 0
      %p59 = por %p57, %p58
      %p60 = scmp.ne.s32.totalorder %s48, %s49
      %p61 = scmp.eq.s32.totalorder %s18, 1
      %p62 = por %p60, %p61
      %p64 = scmp.ne.s32.totalorder %s49, %s63
      %p65 = scmp.eq.s32.totalorder %s18, 0
      %p66 = por %p64, %p65
      %s68 = sadd.s32 %s67, 1
      %p71 = scmp.eq.s32.totalorder %s12, 1
      %p72 = scmp.ne.s32.totalorder %s67, %s69
      %p73 = scmp.eq.s32.totalorder %s12, 0
      %p74 = por %p72, %p73
      %p75 = scmp.ne.s32.totalorder %s67, %s69
      %p76 = scmp.eq.s32.totalorder %s17, 1
      %p77 = por %p75, %p76
      %p78 = scmp.ne.s32.totalorder %s69, %s70
      %p79 = scmp.eq.s32.totalorder %s17, 0
      %p80 = por %p78, %p79
      %p81 = scmp.ne.s32.totalorder %s69, %s70
      %p82 = scmp.eq.s32.totalorder %s18, 1
      %p83 = por %p81, %p82
      %p85 = scmp.ne.s32.totalorder %s70, %s84
      %p86 = scmp.eq.s32.totalorder %s18, 0
      %p87 = por %p85, %p86
      %s88 = ssub.s32 %s12, %s19
      %p89 = scmp.eq.s32.totalorder %s88, 0
      %s91 = sadd.s32 %s90, 1
      %s92 = scalar_select %p89, %s90, %s91
      %p95 = pneg %p89
      %p96 = scmp.eq.s32.totalorder %s12, 1
      %p97 = por %p95, %p96
      %p98 = scmp.ne.s32.totalorder %s90, %s93
      %p99 = scmp.eq.s32.totalorder %s12, 0
      %p100 = por %p98, %p99
      %p101 = scmp.ne.s32.totalorder %s90, %s93
      %p102 = scmp.eq.s32.totalorder %s17, 1
      %p103 = por %p101, %p102
      %p104 = scmp.ne.s32.totalorder %s93, %s94
      %p105 = scmp.eq.s32.totalorder %s17, 0
      %p106 = por %p104, %p105
      %p107 = scmp.ne.s32.totalorder %s93, %s94
      %p108 = scmp.eq.s32.totalorder %s18, 1
      %p109 = por %p107, %p108
      %p111 = scmp.ne.s32.totalorder %s94, %s110
      %p112 = scmp.eq.s32.totalorder %s18, 0
      %p113 = por %p111, %p112
      %p114 = scmp.le.s32.totalorder 1, %s12
      %p115 = scmp.lt.s32.totalorder %s12, 3
      %p116 = pnand %p114, %p115
      %p117 = pneg %p116
      // Predicated region
      $region9: #{conv_block_nhwc.3} parent=5 // pred_check
        _
      $region10: #{conv_block_nhwc.3} parent=5 // pred_check_branch
        %119 = sbr.rel (%p116) target = $region12
      $region11: #{conv_block_nhwc.3} parent=5 // pred_region
        %s120 = ssub.s32 %s12, 1
        // Predicated region
        $region13: #{conv_block_nhwc.3} parent=11 // pred_check
          %p121 = pneg %p59
        $region14: #{conv_block_nhwc.3} parent=11 // pred_check_branch
          %123 = sbr.rel (%p121) target = $region16
        $region15: #{conv_block_nhwc.3} parent=11 // pred_region
          _
        $region16: #{conv_block_nhwc.3} parent=11 // pred_fallthru
          _
        // Predicated region
        $region17: #{conv_block_nhwc.3} parent=11 // pred_check
          %p124 = pneg %p80
        $region18: #{conv_block_nhwc.3} parent=11 // pred_check_branch
          %126 = sbr.rel (%p124) target = $region20
        $region19: #{conv_block_nhwc.3} parent=11 // pred_region
          _
        $region20: #{conv_block_nhwc.3} parent=11 // pred_fallthru
          _
      $region12: #{conv_block_nhwc.3} parent=5 // pred_fallthru
        _
      %p127 = scmp.lt.s32.totalorder %s12, 2
      // Predicated region
      $region21: #{conv_block_nhwc.3} parent=5 // pred_check
        %p128 = pneg %p127
      $region22: #{conv_block_nhwc.3} parent=5 // pred_check_branch
        %130 = sbr.rel (%p128) target = $region24
      $region23: #{conv_block_nhwc.3} parent=5 // pred_region
        // Predicated region
        $region25: #{conv_block_nhwc.3} parent=23 // pred_check
          %p131 = pneg %p32
        $region26: #{conv_block_nhwc.3} parent=23 // pred_check_branch
          %133 = sbr.rel (%p131) target = $region28
        $region27: #{conv_block_nhwc.3} parent=23 // pred_region
          %s134 = smul.u32 8, %s12
          %p135 = scmp.lt.s32.totalorder %s134, 15
          %s136 = scalar_select %p135, %s134, 15
          %s137 = smul.addr %s136, 4
          %s138 = scalar_lea.vmem %s0, %s137
          %s139 = smul.u32 8, %s12
        $region28: #{conv_block_nhwc.3} parent=23 // pred_fallthru
          _
      $region24: #{conv_block_nhwc.3} parent=5 // pred_fallthru
        _
      %p140 = scmp.le.s32.totalorder 1, %s12
      %p141 = scmp.lt.s32.totalorder %s12, 3
      %p142 = pnand %p140, %p141
      %p143 = pneg %p142
      // Predicated region
      $region29: #{conv_block_nhwc.3} parent=5 // pred_check
        _
      $region30: #{conv_block_nhwc.3} parent=5 // pred_check_branch
        %145 = sbr.rel (%p142) target = $region32
      $region31: #{conv_block_nhwc.3} parent=5 // pred_region
        %s146 = ssub.s32 %s12, 1
        %s147 = smul.u32 8, %s17
        %p148 = scmp.lt.s32.totalorder %s147, 15
        %s149 = scalar_select %p148, %s147, 15
        %s150 = smul.addr %s149, 4
        %s151 = scalar_lea.vmem %s0, %s150
        %p152 = pneg %p38
        %p153 = pneg %p35
        %p154 = pneg %p59
        %p155 = pneg %p56
        %p156 = pneg %p80
        %p157 = pneg %p77
        %p158 = pneg %p106
        %p159 = pneg %p103
        %s160 = sand.u32 %s93, 1
        %s161 = scalar_lea.sflag [#allocation3], %s160
        %s162 = sand.u32 %s93, 1
        %s163 = smul.addr %s162, 64
        %s164 = scalar_lea.vmem [#allocation2], %s163
        %s165 = smul.u32 8, %s17
        %p166 = scmp.lt.s32.totalorder %s165, 15
        %s167 = scalar_select %p166, %s165, 15
        %s168 = smul.addr %s167, 4
        %s169 = scalar_lea.vmem %s0, %s168
        %s170 = smul.u32 8, %s17
        %s171 = smul.u32 8, %s17
        %v173 = vld [vmem:[%s169] sm:$0xf]
        %v174 = vld [vmem:[%s169 + $0x4] sm:$0xf]
        %v175 = vld [vmem:[%s169 + $0x8] sm:$0xf]
        %v176 = vld [vmem:[%s169 + $0xc] sm:$0xf]
        %v177 = vld [vmem:[%s169 + $0x10] sm:$0xf]
        %v178 = vld [vmem:[%s169 + $0x14] sm:$0xf]
        %v179 = vld [vmem:[%s169 + $0x18] sm:$0xf]
        %v180 = vld [vmem:[%s169 + $0x1c] sm:$0xf]
        %v181 = vld [vmem:[%s1] sm:$0xf]
        %v182 = vld [vmem:[%s1 + $0x4] sm:$0xf]
        %v183 = vld [vmem:[%s1 + $0x8] sm:$0xf]
        %v184 = vld [vmem:[%s1 + $0xc] sm:$0xf]
        %v185 = vld [vmem:[%s1 + $0x10] sm:$0xf]
        %v186 = vld [vmem:[%s1 + $0x14] sm:$0xf]
        %v187 = vld [vmem:[%s1 + $0x18] sm:$0xf]
        %v188 = vld [vmem:[%s1 + $0x1c] sm:$0xf]
        %v197 = vunpack.c.l.b16 %v173
        %v198 = vunpack.c.l.b16 %v174
        %v199 = vunpack.c.l.b16 %v175
        %v200 = vunpack.c.l.b16 %v176
        %v201 = vunpack.c.l.b16 %v177
        %v202 = vunpack.c.l.b16 %v178
        %v203 = vunpack.c.l.b16 %v179
        %v204 = vunpack.c.l.b16 %v180
        %v205 = vpack.c.b16 %v198, %v197
        %v206 = vpack.c.b16 %v200, %v199
        %v207 = vpack.c.b16 %v202, %v201
        %v208 = vpack.c.b16 %v204, %v203
        %v217 = vunpack.c.l.b16 %v181
        %v218 = vunpack.c.l.b16 %v182
        %v219 = vunpack.c.l.b16 %v183
        %v220 = vunpack.c.l.b16 %v184
        %v221 = vunpack.c.l.b16 %v185
        %v222 = vunpack.c.l.b16 %v186
        %v223 = vunpack.c.l.b16 %v187
        %v224 = vunpack.c.l.b16 %v188
        %v225 = vpack.c.b16 %v218, %v217
        %v226 = vpack.c.b16 %v220, %v219
        %v227 = vpack.c.b16 %v222, %v221
        %v228 = vpack.c.b16 %v224, %v223
        %vm233 = vcmask 523264
        %v235 = vsel %vm233, %v205, 0
        %v238 = vsel %vm233, %v206, 0
        %v241 = vsel %vm233, %v207, 0
        %v244 = vsel %vm233, %v208, 0
        %246 = vmatpush.bf16.msra.mxu0 0
        %247 = vmatpush.bf16.msra.mxu0 0
        %248 = vmatpush.bf16.msra.mxu0 0
        %249 = vmatpush.bf16.msra.mxu0 0
        %250 = vmatpush.bf16.msra.mxu0 %v228
        %251 = vmatpush.bf16.msra.mxu0 %v227
        %252 = vmatpush.bf16.msra.mxu0 %v226
        %253 = vmatpush.bf16.msra.mxu0 %v225
        %254 = vmatmul.bf16.gmra.mxu0 %v235
        %v255 = vpop.f32.mrf.mxu0
        %v256 = vadd.f32 0.0, %v255
        %v257 = vpop.f32.mrf.mxu0
        %v258 = vadd.f32 0.0, %v257
        %259 = vmatmul.bf16.gmra.mxu0 %v238
        %v260 = vpop.f32.mrf.mxu0
        %v261 = vadd.f32 0.0, %v260
        %v262 = vpop.f32.mrf.mxu0
        %v263 = vadd.f32 0.0, %v262
        %264 = vmatmul.bf16.gmra.mxu0 %v241
        %v265 = vpop.f32.mrf.mxu0
        %v266 = vadd.f32 0.0, %v265
        %v267 = vpop.f32.mrf.mxu0
        %v268 = vadd.f32 0.0, %v267
        %269 = vmatmul.bf16.gmra.mxu0 %v244
        %v270 = vpop.f32.mrf.mxu0
        %v271 = vadd.f32 0.0, %v270
        %v272 = vpop.f32.mrf.mxu0
        %v273 = vadd.f32 0.0, %v272
        %274 = vdwg.mxu0
        %v275 = vld [vmem:[%s2] sm:$0x1]
        %v276 = vld [vmem:[%s2 + $0x1] sm:$0x1]
        %v277 = vperm.slane %v275, 0
        %v278 = vmul.f32 %v256, %v277
        %v279 = vmul.f32 %v258, %v277
        %v280 = vmul.f32 %v261, %v277
        %v281 = vmul.f32 %v263, %v277
        %v282 = vmul.f32 %v266, %v277
        %v283 = vmul.f32 %v268, %v277
        %v284 = vmul.f32 %v271, %v277
        %v285 = vmul.f32 %v273, %v277
        %v286 = vperm.slane %v276, 0
        %v287 = vadd.f32 %v278, %v286
        %v288 = vadd.f32 %v279, %v286
        %v289 = vadd.f32 %v280, %v286
        %v290 = vadd.f32 %v281, %v286
        %v291 = vadd.f32 %v282, %v286
        %v292 = vadd.f32 %v283, %v286
        %v293 = vadd.f32 %v284, %v286
        %v294 = vadd.f32 %v285, %v286
        %vm295 = vcmp.ge.f32.partialorder %v287, 0.0
        %vm296 = vcmp.ge.f32.partialorder %v288, 0.0
        %vm297 = vcmp.ge.f32.partialorder %v289, 0.0
        %vm298 = vcmp.ge.f32.partialorder %v290, 0.0
        %vm299 = vcmp.ge.f32.partialorder %v291, 0.0
        %vm300 = vcmp.ge.f32.partialorder %v292, 0.0
        %vm301 = vcmp.ge.f32.partialorder %v293, 0.0
        %vm302 = vcmp.ge.f32.partialorder %v294, 0.0
        %v303 = vmul.f32 %v287, 0.2
        %v304 = vmul.f32 %v288, 0.2
        %v305 = vmul.f32 %v289, 0.2
        %v306 = vmul.f32 %v290, 0.2
        %v307 = vmul.f32 %v291, 0.2
        %v308 = vmul.f32 %v292, 0.2
        %v309 = vmul.f32 %v293, 0.2
        %v310 = vmul.f32 %v294, 0.2
        %v311 = vsel %vm295, %v287, %v303
        %v312 = vsel %vm296, %v288, %v304
        %v313 = vsel %vm297, %v289, %v305
        %v314 = vsel %vm298, %v290, %v306
        %v315 = vsel %vm299, %v291, %v307
        %v316 = vsel %vm300, %v292, %v308
        %v317 = vsel %vm301, %v293, %v309
        %v318 = vsel %vm302, %v294, %v310
        %319 = vst [vmem:[%s164] sm:$0xff] %v311
        %320 = vst [vmem:[%s164 + $0x8] sm:$0xff] %v312
        %321 = vst [vmem:[%s164 + $0x10] sm:$0xff] %v313
        %322 = vst [vmem:[%s164 + $0x18] sm:$0xff] %v314
        %323 = vst [vmem:[%s164 + $0x20] sm:$0xff] %v315
        %324 = vst [vmem:[%s164 + $0x28] sm:$0xff] %v316
        %325 = vst [vmem:[%s164 + $0x30] sm:$0xff] %v317
        %326 = vst [vmem:[%s164 + $0x38] sm:$0xff] %v318
        %s327 = sand.u32 %s93, 1
        %s328 = scalar_lea.sflag [#allocation3], %s327
        %s329 = sand.u32 %s93, 1
        %s330 = smul.addr %s329, 64
        %s331 = scalar_lea.vmem [#allocation2], %s330
        // Predicated region
        $region33: #{conv_block_nhwc.3} parent=31 // pred_check
          %p332 = pneg %p103
        $region34: #{conv_block_nhwc.3} parent=31 // pred_check_branch
          %334 = sbr.rel (%p332) target = $region36
        $region35: #{conv_block_nhwc.3} parent=31 // pred_region
          %s335 = smul.u32 8, %s17
          %337 = vsyncadd %s328, 0
          %s338 = smul.addr %s335, 8
          %s339 = scalar_lea.hbm %s3, %s338
          %s340 = sshll.u32 %s331, 4
          %s341 = int_to_ptr.vmem [resolvable:$true] %s340
          %s342 = sshll.u32 %s339, 4
          %s343 = int_to_ptr.hbm [resolvable:$true] %s342
          %348 = dma.vmem_to_hbm [thread:$0]  %s341, 1024, %s343, %s328, 128, 128, 8
        $region36: #{conv_block_nhwc.3} parent=31 // pred_fallthru
          _
      $region32: #{conv_block_nhwc.3} parent=5 // pred_fallthru
        _
      %p349 = scmp.le.s32.totalorder 2, %s12
      // Predicated region
      $region37: #{conv_block_nhwc.3} parent=5 // pred_check
        %p350 = pneg %p349
      $region38: #{conv_block_nhwc.3} parent=5 // pred_check_branch
        %352 = sbr.rel (%p350) target = $region40
      $region39: #{conv_block_nhwc.3} parent=5 // pred_region
        %s353 = ssub.s32 %s12, 2
        // Predicated region
        $region41: #{conv_block_nhwc.3} parent=39 // pred_check
          %p354 = pneg %p109
        $region42: #{conv_block_nhwc.3} parent=39 // pred_check_branch
          %356 = sbr.rel (%p354) target = $region44
        $region43: #{conv_block_nhwc.3} parent=39 // pred_region
          %s357 = sand.u32 %s94, 1
          %s358 = scalar_lea.sflag [#allocation3], %s357
          %s359 = sand.u32 %s94, 1
          %s360 = smul.addr %s359, 64
          %s361 = scalar_lea.vmem [#allocation2], %s360
          %363 = dma.done %s358, 1024
        $region44: #{conv_block_nhwc.3} parent=39 // pred_fallthru
          _
      $region40: #{conv_block_nhwc.3} parent=5 // pred_fallthru
        _
    $region6: #{conv_block_nhwc.3} parent=1 // loop_footer
      %s16 = sadd.s32 1, %s12
    $region7: #{conv_block_nhwc.3} parent=1 // loop_footer_branch
      %11 = sbr.rel target = $region3
    $region8: #{conv_block_nhwc.3} parent=1 // loop_exit
      _
    %364 = vsyncpa [#allocation3], 1
    %s365 = scalar_lea.sflag [#allocation3], 1
    %366 = vsyncpa %s365, 1

// kernel: conv_block_nhwc.2
$region0: #{conv_block_nhwc.2}
  #allocation0 [shape = 'u32[]', space=smem, size = 0x4, offset = 0x4, fixed_abs, tag = 'smem constant byte address 0x4 - core index']
  #allocation1 [shape = 'u32[72,128]{1,0:T(1,128)}', space=vmem, size = 0x9000, scoped, tag = 'internal scratch']
  %s0 = inlined_call_operand.vmem [shape: bf16[128,64], index: 0, kind: input, shape index: {}]
  %s1 = inlined_call_operand.vmem [shape: bf16[64,128], index: 1, kind: input, shape index: {}]
  %s2 = inlined_call_operand.vmem [shape: f32[8,128], index: 2, kind: input, shape index: {}]
  %s3 = inlined_call_operand.vmem [shape: f32[8,128], index: 3, kind: output, shape index: {}]
  %s4 = sld [smem:[#allocation0]]
  $region53: #{conv_block_nhwc.2} parent=0
    _
  %s6 = ssub.s32 1, %s4
  %s7 = scalar_select 0, %s6, %s4
  loop: start=0, step=1, limit=4
  $region2: #{conv_block_nhwc.2} parent=0 // loop_pre_header
    _
  $region3: #{conv_block_nhwc.2} parent=0 // loop_header
    %s9 = sphi 0, %s13
    %p10 = scmp.ge.s32.totalorder %s9, 4
    %s19 = sphi 0, %s21
    %s22 = sphi 0, %s19
    %s23 = sphi 0, %s22
    %s39 = sphi 0, %s23
    %s43 = sphi 0, %s43
    %s45 = sphi 0, %s43
    %s46 = sphi 0, %s45
    %s60 = sphi 0, %s46
    %s64 = sphi 0, %s64
    %s66 = sphi 0, %s64
    %s67 = sphi 0, %s66
    %s81 = sphi 0, %s67
    %s85 = sphi 0, %s85
    %s87 = sphi 0, %s85
    %s88 = sphi 0, %s87
    %s102 = sphi 0, %s88
  $region4: #{conv_block_nhwc.2} parent=0 // loop_header_branch
    %12 = sbr.rel (%p10) target = $region8
  $region5: #{conv_block_nhwc.2} parent=0 // loop_body
    %s14 = ssub.s32 %s9, 1
    %s15 = ssub.s32 %s9, 2
    %s16 = sadd.s32 %s9, 1
    %s17 = ssub.s32 %s9, %s16
    %p18 = scmp.eq.s32.totalorder %s17, 0
    %s20 = sadd.s32 %s19, 1
    %s21 = scalar_select %p18, %s19, %s20
    %p24 = pneg %p18
    %p25 = scmp.eq.s32.totalorder %s9, 1
    %p26 = por %p24, %p25
    %p27 = scmp.ne.s32.totalorder %s19, %s22
    %p28 = scmp.eq.s32.totalorder %s9, 0
    %p29 = por %p27, %p28
    %p30 = scmp.ne.s32.totalorder %s19, %s22
    %p31 = scmp.eq.s32.totalorder %s14, 1
    %p32 = por %p30, %p31
    %p33 = scmp.ne.s32.totalorder %s22, %s23
    %p34 = scmp.eq.s32.totalorder %s14, 0
    %p35 = por %p33, %p34
    %p36 = scmp.ne.s32.totalorder %s22, %s23
    %p37 = scmp.eq.s32.totalorder %s15, 1
    %p38 = por %p36, %p37
    %p40 = scmp.ne.s32.totalorder %s23, %s39
    %p41 = scmp.eq.s32.totalorder %s15, 0
    %p42 = por %p40, %p41
    %s44 = sadd.s32 %s43, 1
    %p47 = scmp.eq.s32.totalorder %s9, 1
    %p48 = scmp.ne.s32.totalorder %s43, %s45
    %p49 = scmp.eq.s32.totalorder %s9, 0
    %p50 = por %p48, %p49
    %p51 = scmp.ne.s32.totalorder %s43, %s45
    %p52 = scmp.eq.s32.totalorder %s14, 1
    %p53 = por %p51, %p52
    %p54 = scmp.ne.s32.totalorder %s45, %s46
    %p55 = scmp.eq.s32.totalorder %s14, 0
    %p56 = por %p54, %p55
    %p57 = scmp.ne.s32.totalorder %s45, %s46
    %p58 = scmp.eq.s32.totalorder %s15, 1
    %p59 = por %p57, %p58
    %p61 = scmp.ne.s32.totalorder %s46, %s60
    %p62 = scmp.eq.s32.totalorder %s15, 0
    %p63 = por %p61, %p62
    %s65 = sadd.s32 %s64, 1
    %p68 = scmp.eq.s32.totalorder %s9, 1
    %p69 = scmp.ne.s32.totalorder %s64, %s66
    %p70 = scmp.eq.s32.totalorder %s9, 0
    %p71 = por %p69, %p70
    %p72 = scmp.ne.s32.totalorder %s64, %s66
    %p73 = scmp.eq.s32.totalorder %s14, 1
    %p74 = por %p72, %p73
    %p75 = scmp.ne.s32.totalorder %s66, %s67
    %p76 = scmp.eq.s32.totalorder %s14, 0
    %p77 = por %p75, %p76
    %p78 = scmp.ne.s32.totalorder %s66, %s67
    %p79 = scmp.eq.s32.totalorder %s15, 1
    %p80 = por %p78, %p79
    %p82 = scmp.ne.s32.totalorder %s67, %s81
    %p83 = scmp.eq.s32.totalorder %s15, 0
    %p84 = por %p82, %p83
    %s86 = sadd.s32 %s85, 1
    %p89 = scmp.eq.s32.totalorder %s9, 1
    %p90 = scmp.ne.s32.totalorder %s85, %s87
    %p91 = scmp.eq.s32.totalorder %s9, 0
    %p92 = por %p90, %p91
    %p93 = scmp.ne.s32.totalorder %s85, %s87
    %p94 = scmp.eq.s32.totalorder %s14, 1
    %p95 = por %p93, %p94
    %p96 = scmp.ne.s32.totalorder %s87, %s88
    %p97 = scmp.eq.s32.totalorder %s14, 0
    %p98 = por %p96, %p97
    %p99 = scmp.ne.s32.totalorder %s87, %s88
    %p100 = scmp.eq.s32.totalorder %s15, 1
    %p101 = por %p99, %p100
    %p103 = scmp.ne.s32.totalorder %s88, %s102
    %p104 = scmp.eq.s32.totalorder %s15, 0
    %p105 = por %p103, %p104
    %p106 = scmp.le.s32.totalorder 1, %s9
    %p107 = scmp.lt.s32.totalorder %s9, 3
    %p108 = pnand %p106, %p107
    %p109 = pneg %p108
    // Predicated region
    $region9: #{conv_block_nhwc.2} parent=5 // pred_check
      _
    $region10: #{conv_block_nhwc.2} parent=5 // pred_check_branch
      %111 = sbr.rel (%p108) target = $region12
    $region11: #{conv_block_nhwc.2} parent=5 // pred_region
      %s112 = ssub.s32 %s9, 1
      // Predicated region
      $region13: #{conv_block_nhwc.2} parent=11 // pred_check
        %p113 = pneg %p56
      $region14: #{conv_block_nhwc.2} parent=11 // pred_check_branch
        %115 = sbr.rel (%p113) target = $region16
      $region15: #{conv_block_nhwc.2} parent=11 // pred_region
        _
      $region16: #{conv_block_nhwc.2} parent=11 // pred_fallthru
        _
      // Predicated region
      $region17: #{conv_block_nhwc.2} parent=11 // pred_check
        %p116 = pneg %p77
      $region18: #{conv_block_nhwc.2} parent=11 // pred_check_branch
        %118 = sbr.rel (%p116) target = $region20
      $region19: #{conv_block_nhwc.2} parent=11 // pred_region
        _
      $region20: #{conv_block_nhwc.2} parent=11 // pred_fallthru
        _
    $region12: #{conv_block_nhwc.2} parent=5 // pred_fallthru
      _
    %p119 = scmp.lt.s32.totalorder %s9, 2
    // Predicated region
    $region21: #{conv_block_nhwc.2} parent=5 // pred_check
      %p120 = pneg %p119
    $region22: #{conv_block_nhwc.2} parent=5 // pred_check_branch
      %122 = sbr.rel (%p120) target = $region24
    $region23: #{conv_block_nhwc.2} parent=5 // pred_region
      // Predicated region
      $region25: #{conv_block_nhwc.2} parent=23 // pred_check
        %p123 = pneg %p29
      $region26: #{conv_block_nhwc.2} parent=23 // pred_check_branch
        %125 = sbr.rel (%p123) target = $region28
      $region27: #{conv_block_nhwc.2} parent=23 // pred_region
        %s126 = smul.u32 8, %s9
        %p127 = scmp.lt.s32.totalorder %s126, 15
        %s128 = scalar_select %p127, %s126, 15
        %s129 = smul.addr %s128, 4
        %s130 = scalar_lea.vmem %s0, %s129
        %s131 = smul.u32 8, %s9
      $region28: #{conv_block_nhwc.2} parent=23 // pred_fallthru
        _
    $region24: #{conv_block_nhwc.2} parent=5 // pred_fallthru
      _
    %p132 = scmp.le.s32.totalorder 1, %s9
    %p133 = scmp.lt.s32.totalorder %s9, 3
    %p134 = pnand %p132, %p133
    %p135 = pneg %p134
    // Predicated region
    $region29: #{conv_block_nhwc.2} parent=5 // pred_check
      _
    $region30: #{conv_block_nhwc.2} parent=5 // pred_check_branch
      %137 = sbr.rel (%p134) target = $region32
    $region31: #{conv_block_nhwc.2} parent=5 // pred_region
      %s138 = ssub.s32 %s9, 1
      %s139 = smul.u32 8, %s14
      %p140 = scmp.lt.s32.totalorder %s139, 15
      %s141 = scalar_select %p140, %s139, 15
      %s142 = smul.addr %s141, 4
      %s143 = scalar_lea.vmem %s0, %s142
      %p144 = pneg %p35
      %p145 = pneg %p32
      %p146 = pneg %p56
      %p147 = pneg %p53
      %p148 = pneg %p77
      %p149 = pneg %p74
      %p150 = pneg %p98
      %p151 = pneg %p95
      %s152 = smul.u32 8, %s14
      %p153 = scmp.lt.s32.totalorder %s152, 15
      %s154 = scalar_select %p153, %s152, 15
      %s155 = smul.addr %s154, 4
      %s156 = scalar_lea.vmem %s0, %s155
      %s157 = smul.u32 8, %s14
      %p159 = scmp.eq.s32.totalorder %s14, 0
      // Predicated region
      $region33: #{conv_block_nhwc.2} parent=31 // pred_check
        %p160 = pneg %p159
      $region34: #{conv_block_nhwc.2} parent=31 // pred_check_branch
        %162 = sbr.rel (%p160) target = $region36
      $region35: #{conv_block_nhwc.2} parent=31 // pred_region
        %163 = vst [vmem:[%s3] sm:$0xff] 0.0
      $region36: #{conv_block_nhwc.2} parent=31 // pred_fallthru
        _
      %v164 = vld [vmem:[%s156] sm:$0xf]
      %v165 = vld [vmem:[%s156 + $0x4] sm:$0xf]
      %v166 = vld [vmem:[%s156 + $0x8] sm:$0xf]
      %v167 = vld [vmem:[%s156 + $0xc] sm:$0xf]
      %v168 = vld [vmem:[%s156 + $0x10] sm:$0xf]
      %v169 = vld [vmem:[%s156 + $0x14] sm:$0xf]
      %v170 = vld [vmem:[%s156 + $0x18] sm:$0xf]
      %v171 = vld [vmem:[%s156 + $0x1c] sm:$0xf]
      %v172 = vld [vmem:[%s1] sm:$0xf]
      %v173 = vld [vmem:[%s1 + $0x4] sm:$0xf]
      %v174 = vld [vmem:[%s1 + $0x8] sm:$0xf]
      %v175 = vld [vmem:[%s1 + $0xc] sm:$0xf]
      %v176 = vld [vmem:[%s1 + $0x10] sm:$0xf]
      %v177 = vld [vmem:[%s1 + $0x14] sm:$0xf]
      %v178 = vld [vmem:[%s1 + $0x18] sm:$0xf]
      %v179 = vld [vmem:[%s1 + $0x1c] sm:$0xf]
      %v188 = vunpack.c.l.b16 %v164
      %v189 = vunpack.c.l.b16 %v165
      %v190 = vunpack.c.l.b16 %v166
      %v191 = vunpack.c.l.b16 %v167
      %v192 = vunpack.c.l.b16 %v168
      %v193 = vunpack.c.l.b16 %v169
      %v194 = vunpack.c.l.b16 %v170
      %v195 = vunpack.c.l.b16 %v171
      %v196 = vpack.c.b16 %v189, %v188
      %v197 = vpack.c.b16 %v191, %v190
      %v198 = vpack.c.b16 %v193, %v192
      %v199 = vpack.c.b16 %v195, %v194
      %v208 = vunpack.c.l.b16 %v172
      %v209 = vunpack.c.l.b16 %v173
      %v210 = vunpack.c.l.b16 %v174
      %v211 = vunpack.c.l.b16 %v175
      %v212 = vunpack.c.l.b16 %v176
      %v213 = vunpack.c.l.b16 %v177
      %v214 = vunpack.c.l.b16 %v178
      %v215 = vunpack.c.l.b16 %v179
      %v216 = vpack.c.b16 %v209, %v208
      %v217 = vpack.c.b16 %v211, %v210
      %v218 = vpack.c.b16 %v213, %v212
      %v219 = vpack.c.b16 %v215, %v214
      %vm224 = vcmask 523264
      %v226 = vsel %vm224, %v196, 0
      %v229 = vsel %vm224, %v197, 0
      %v232 = vsel %vm224, %v198, 0
      %v235 = vsel %vm224, %v199, 0
      %237 = vmatpush.bf16.msra.mxu0 0
      %238 = vmatpush.bf16.msra.mxu0 0
      %239 = vmatpush.bf16.msra.mxu0 0
      %240 = vmatpush.bf16.msra.mxu0 0
      %241 = vmatpush.bf16.msra.mxu0 %v219
      %242 = vmatpush.bf16.msra.mxu0 %v218
      %243 = vmatpush.bf16.msra.mxu0 %v217
      %244 = vmatpush.bf16.msra.mxu0 %v216
      %245 = vmatmul.bf16.gmra.mxu0 %v226
      %v246 = vpop.f32.mrf.mxu0
      %v247 = vadd.f32 0.0, %v246
      %v248 = vpop.f32.mrf.mxu0
      %v249 = vadd.f32 0.0, %v248
      %250 = vmatmul.bf16.gmra.mxu0 %v229
      %v251 = vpop.f32.mrf.mxu0
      %v252 = vadd.f32 0.0, %v251
      %v253 = vpop.f32.mrf.mxu0
      %v254 = vadd.f32 0.0, %v253
      %255 = vmatmul.bf16.gmra.mxu0 %v232
      %v256 = vpop.f32.mrf.mxu0
      %v257 = vadd.f32 0.0, %v256
      %v258 = vpop.f32.mrf.mxu0
      %v259 = vadd.f32 0.0, %v258
      %260 = vmatmul.bf16.gmra.mxu0 %v235
      %v261 = vpop.f32.mrf.mxu0
      %v262 = vadd.f32 0.0, %v261
      %v263 = vpop.f32.mrf.mxu0
      %v264 = vadd.f32 0.0, %v263
      %265 = vdwg.mxu0
      %v266 = vld [vmem:[%s3] sm:$0x1]
      %v267 = vadd.f32 %v247, %v249
      %v268 = vadd.f32 %v267, %v252
      %v269 = vadd.f32 %v268, %v254
      %v270 = vadd.f32 %v269, %v257
      %v271 = vadd.f32 %v270, %v259
      %v272 = vadd.f32 %v271, %v262
      %v273 = vadd.f32 %v272, %v264
      %v274 = vrot.slane %v273, 4
      %v275 = vadd.f32 %v273, %v274
      %v276 = vrot.slane %v275, 2
      %v277 = vadd.f32 %v275, %v276
      %v278 = vrot.slane %v277, 1
      %v279 = vadd.f32 %v277, %v278
      %v280 = vadd.f32 %v266, %v279
      %281 = vst [vmem:[%s3] sm:$0x1] %v280
      %v282 = vld [vmem:[%s3 + $0x1] sm:$0x1]
      %v283 = vmul.f32 %v247, %v247
      %v284 = vmul.f32 %v249, %v249
      %v285 = vmul.f32 %v252, %v252
      %v286 = vmul.f32 %v254, %v254
      %v287 = vmul.f32 %v257, %v257
      %v288 = vmul.f32 %v259, %v259
      %v289 = vmul.f32 %v262, %v262
      %v290 = vmul.f32 %v264, %v264
      %v291 = vadd.f32 %v283, %v284
      %v292 = vadd.f32 %v291, %v285
      %v293 = vadd.f32 %v292, %v286
      %v294 = vadd.f32 %v293, %v287
      %v295 = vadd.f32 %v294, %v288
      %v296 = vadd.f32 %v295, %v289
      %v297 = vadd.f32 %v296, %v290
      %v298 = vrot.slane %v297, 4
      %v299 = vadd.f32 %v297, %v298
      %v300 = vrot.slane %v299, 2
      %v301 = vadd.f32 %v299, %v300
      %v302 = vrot.slane %v301, 1
      %v303 = vadd.f32 %v301, %v302
      %v304 = vadd.f32 %v282, %v303
      %305 = vst [vmem:[%s3 + $0x1] sm:$0x1] %v304
      %p306 = scmp.eq.s32.totalorder %s14, 1
      // Predicated region
      $region37: #{conv_block_nhwc.2} parent=31 // pred_check
        %p307 = pneg %p306
      $region38: #{conv_block_nhwc.2} parent=31 // pred_check_branch
        %309 = sbr.rel (%p307) target = $region40
      $region39: #{conv_block_nhwc.2} parent=31 // pred_region
        %v310 = vld [vmem:[%s3] sm:$0x1]
        %v311 = vld [vmem:[%s3 + $0x1] sm:$0x1]
        %v312 = vmul.f32 %v310, 0.0078125
        %v313 = vmul.f32 %v311, 0.0078125
        %v314 = vmul.f32 %v312, %v312
        %v315 = vsub.f32 %v313, %v314
        %v316 = vmax.f32 %v315, 0.0
        %v317 = vld [vmem:[%s2] sm:$0x1]
        %v318 = vld [vmem:[%s2 + $0x1] sm:$0x1]
        %v319 = vadd.f32 %v316, 1e-05
        %v320 = vrsqrt.pop %v319
        %v321 = vmul.f32 %v320, %v319
        %v322 = vmul.f32 %v321, %v320
        %v323 = vmul.f32 0.5, %v322
        %v324 = vsub.f32 1.5, %v323
        %v325 = vmul.f32 %v320, %v324
        %vm326 = vweird.f32 %v319
        %vm327 = vweird.f32 %v320
        %vm328 = vmor %vm326, %vm327
        %v329 = vsel %vm328, %v320, %v325
        %v330 = vmul.f32 %v317, %v329
        %v331 = vmul.f32 %v312, %v330
        %v332 = vsub.f32 %v318, %v331
        %333 = vst [vmem:[%s3] sm:$0x1] %v330
        %334 = vst [vmem:[%s3 + $0x1] sm:$0x1] %v332
      $region40: #{conv_block_nhwc.2} parent=31 // pred_fallthru
        _
      // Predicated region
      $region41: #{conv_block_nhwc.2} parent=31 // pred_check
        %p335 = pneg %p95
      $region42: #{conv_block_nhwc.2} parent=31 // pred_check_branch
        %337 = sbr.rel (%p335) target = $region44
      $region43: #{conv_block_nhwc.2} parent=31 // pred_region
        _
      $region44: #{conv_block_nhwc.2} parent=31 // pred_fallthru
        _
      // Predicated region
      $region45: #{conv_block_nhwc.2} parent=31 // pred_check
        %p338 = pneg %p95
      $region46: #{conv_block_nhwc.2} parent=31 // pred_check_branch
        %340 = sbr.rel (%p338) target = $region48
      $region47: #{conv_block_nhwc.2} parent=31 // pred_region
        _
      $region48: #{conv_block_nhwc.2} parent=31 // pred_fallthru
        _
    $region32: #{conv_block_nhwc.2} parent=5 // pred_fallthru
      _
    %p341 = scmp.le.s32.totalorder 2, %s9
    // Predicated region
    $region49: #{conv_block_nhwc.2} parent=5 // pred_check
      %p342 = pneg %p341
    $region50: #{conv_block_nhwc.2} parent=5 // pred_check_branch
      %344 = sbr.rel (%p342) target = $region52
    $region51: #{conv_block_nhwc.2} parent=5 // pred_region
      %s345 = ssub.s32 %s9, 2
    $region52: #{conv_block_nhwc.2} parent=5 // pred_fallthru
      _
  $region6: #{conv_block_nhwc.2} parent=0 // loop_footer
    %s13 = sadd.s32 1, %s9
  $region7: #{conv_block_nhwc.2} parent=0 // loop_footer_branch
    %8 = sbr.rel target = $region3
  $region8: #{conv_block_nhwc.2} parent=0 // loop_exit
    _

</llo_original>
